<compile_context>
chip_gen: v6e
topology: v6e:2x2x1
jax: 0.10.0
libtpu: 0.0.40
codegen_flags: <defaults>
</compile_context>

<pallas_src>
import jax
import jax.numpy as jnp
from jax.experimental import pallas as pl
from jax.experimental.pallas import tpu as pltpu

LANE_TILE = 32768        # default lane (matrix) tile for the large-N path
SMALL_N_BYPASS = 1024    # below this, fused XLA concat beats kernel launch cost


def _round_up(x, m):
    return ((x + m - 1) // m) * m


def _combine_kernel(rt_ref, out_ref):
    # rt_ref : (12, T)  row-major flattened [R | t] per matrix, matrices on lanes
    # out_ref: (16, T)  row-major flattened 4x4  [R t; 0 0 0 1]
    T = out_ref.shape[1]
    dt = out_ref.dtype
    bottom = jnp.concatenate(
        [jnp.zeros((3, T), dtype=dt), jnp.ones((1, T), dtype=dt)], axis=0
    )
    # Single assembled, full-block store (unmasked sublane-tile stores) instead
    # of many sublane-misaligned partial writes.
    out_ref[...] = jnp.concatenate([rt_ref[...], bottom], axis=0)


def roto_trans_combiner(rotations, translations, *, force_pallas=False, lane_tile=None):
    """JAX/Pallas equivalent of RotoTransCombiner.forward.

    rotations:    (B, V, 3, 3)
    translations: (B, V, 3, 1) or (B, V, 1, 1)
    returns:      (B, V, 4, 4)
    """
    B, V = rotations.shape[0], rotations.shape[1]
    out_dtype = jnp.result_type(rotations.dtype, translations.dtype)

    # torch.cat-with-zeros branch for depth-only (B, V, 1, 1) translations.
    if translations.shape[-2] == 1:
        zeros = jnp.zeros((B, V, 2, 1), dtype=translations.dtype)
        trans = jnp.concatenate([zeros, translations], axis=-2)
    else:
        trans = translations

    N = B * V

    # Small-N bypass: fused XLA concat — no kernel launch, no transposes.
    if (not force_pallas) and N <= SMALL_N_BYPASS:
        rt = jnp.concatenate(
            [rotations.astype(out_dtype), trans.astype(out_dtype)], axis=-1
        )                                                           # (B, V, 3, 4)
        bottom = jnp.broadcast_to(
            jnp.array([0.0, 0.0, 0.0, 1.0], dtype=out_dtype).reshape(1, 1, 1, 4),
            (B, V, 1, 4),
        )
        return jnp.concatenate([rt, bottom], axis=-2)               # (B, V, 4, 4)

    # Pre-interleave into one lane-dense (12, N) slab: single input stream,
    # purely aligned copies inside the kernel.
    rt12 = (
        jnp.concatenate([rotations.astype(out_dtype), trans.astype(out_dtype)],
                        axis=-1)                                    # (B, V, 3, 4)
        .reshape(N, 12)
        .T                                                          # (12, N)
    )
    # TODO(synk): the (N,12)->(12,N) and (16,N)->(N,16) wrapper transposes are
    # extra HBM passes; they can only be removed if producer/consumer accept
    # the lane-dense slab layout directly.

    max_tile = LANE_TILE if lane_tile is None else lane_tile
    if N <= max_tile:
        # Single block equal to the full array dims: no (8,128) alignment
        # requirement, no padding, no masked stores beyond the natural tail.
        tile_n = N
    else:
        # Multiple of 128 lanes, and at least 2 grid steps so both v7x
        # TensorCores get a share of the stream ("parallel" lane axis).
        tile_n = min(max_tile, _round_up(pl.cdiv(N, 2), 128))
    grid = (pl.cdiv(N, tile_n),)

    out_t = pl.pallas_call(
        _combine_kernel,
        out_shape=jax.ShapeDtypeStruct((16, N), out_dtype),
        grid=grid,
        in_specs=[pl.BlockSpec((12, tile_n), lambda i: (0, i))],
        out_specs=pl.BlockSpec((16, tile_n), lambda i: (0, i)),
        compiler_params=pltpu.CompilerParams(
            dimension_semantics=("parallel",),
            vmem_limit_bytes=64 * 1024 * 1024,   # headroom for v5e's 16 MiB default
        ),
    )(rt12)

    # (16, N) -> (N, 16) -> (B, V, 4, 4)
    return out_t.T.reshape(B, V, 4, 4)


def _reference(rotations, translations):
    B, V = rotations.shape[0], rotations.shape[1]
    if translations.shape[-2] == 1:
        zeros = jnp.zeros((B, V, 2, 1), dtype=translations.dtype)
        trans = jnp.concatenate([zeros, translations], axis=-2)
    else:
        trans = translations
    rt = jnp.concatenate([rotations, trans], axis=-1)                 # (B,V,3,4)
    bottom = jnp.tile(
        jnp.array([0.0, 0.0, 0.0, 1.0], dtype=rt.dtype), (B, V, 1, 1)
    )                                                                 # (B,V,1,4)
    return jnp.concatenate([rt, bottom], axis=-2)                     # (B,V,4,4)


if __name__ == "__main__":
    key = jax.random.PRNGKey(0)
    k1, k2, k3, k4, k5 = jax.random.split(key, 5)

    # ---- Case 1: typical small multiview shapes (auto XLA bypass) ----
    B, V = 2, 4
    rotations = jax.random.normal(k1, (B, V, 3, 3), dtype=jnp.float32)
    trans_full = jax.random.normal(k2, (B, V, 3, 1), dtype=jnp.float32)
    out1 = jax.block_until_ready(roto_trans_combiner(rotations, trans_full))
    assert out1.shape == (B, V, 4, 4)
    assert jnp.allclose(out1, _reference(rotations, trans_full), atol=1e-6), \
        "mismatch (bypass, full trans)"

    # ---- Case 2: depth-only (B, V, 1, 1) translations (zero-padded branch) ----
    trans_z = jax.random.normal(k3, (B, V, 1, 1), dtype=jnp.float32)
    out2 = jax.block_until_ready(roto_trans_combiner(rotations, trans_z))
    assert jnp.allclose(out2, _reference(rotations, trans_z), atol=1e-6), \
        "mismatch (bypass, 1-row trans)"

    # ---- Case 3: force the Pallas kernel on the small shapes (single block) ----
    out3 = jax.block_until_ready(
        roto_trans_combiner(rotations, trans_full, force_pallas=True))
    assert jnp.allclose(out3, _reference(rotations, trans_full), atol=1e-6), \
        "mismatch (pallas, full trans)"
    out3z = jax.block_until_ready(
        roto_trans_combiner(rotations, trans_z, force_pallas=True))
    assert jnp.allclose(out3z, _reference(rotations, trans_z), atol=1e-6), \
        "mismatch (pallas, 1-row trans)"

    # ---- Case 4: multi-step tiled Pallas path with a ragged tail ----
    B2, V2 = 5, 246  # N = 1230 > SMALL_N_BYPASS; tile 512 -> 3 steps, ragged tail
    rot_big = jax.random.normal(k4, (B2, V2, 3, 3), dtype=jnp.float32)
    trans_big = jax.random.normal(k5, (B2, V2, 3, 1), dtype=jnp.float32)
    out4 = jax.block_until_ready(
        roto_trans_combiner(rot_big, trans_big, lane_tile=512))
    assert out4.shape == (B2, V2, 4, 4)
    assert jnp.allclose(out4, _reference(rot_big, trans_big), atol=1e-6), \
        "mismatch (tiled path)"

    print("KERNEL_OK")
</pallas_src>

<mosaic_0001>
module attributes {stable_mosaic.version = 11 : i64} {
  func.func @_combine_kernel(%arg0: i32, %arg1: memref<12x8xf32, #tpu.memory_space<vmem>>, %arg2: memref<16x8xf32, #tpu.memory_space<vmem>>) attributes {dimension_semantics = [#tpu.dimension_semantics<parallel>], iteration_bounds = array<i64: 1>, scalar_prefetch = 0 : i64, scratch_operands = 0 : i64, tpu.core_type = #tpu.core_type<tc>, window_params = [{transform_indices = @transform_0, window_bounds = array<i64: 12, 8>}, {transform_indices = @transform_1, window_bounds = array<i64: 16, 8>}]} {
    %cst = arith.constant 0.000000e+00 : f32
    %0 = vector.broadcast %cst : f32 to vector<3x8xf32>
    %cst_0 = arith.constant 1.000000e+00 : f32
    %1 = vector.broadcast %cst_0 : f32 to vector<1x8xf32>
    %2 = tpu.concatenate %0, %1 in 0 : vector<3x8xf32>, vector<1x8xf32> -> vector<4x8xf32>
    %c0 = arith.constant 0 : index
    %c0_1 = arith.constant 0 : index
    %3 = vector.load %arg1[%c0, %c0_1] : memref<12x8xf32, #tpu.memory_space<vmem>>, vector<12x8xf32>
    %4 = tpu.concatenate %3, %2 in 0 : vector<12x8xf32>, vector<4x8xf32> -> vector<16x8xf32>
    %c0_2 = arith.constant 0 : index
    %c0_3 = arith.constant 0 : index
    %5 = vector.load %arg2[%c0_2, %c0_3] : memref<16x8xf32, #tpu.memory_space<vmem>>, vector<16x8xf32>
    tpu.vector_store %arg2[%c0_2, %c0_3], %4 {strides = array<i32>} : memref<16x8xf32, #tpu.memory_space<vmem>>, vector<16x8xf32>,
    return
  }
  func.func @transform_0(%arg0: i32) -> (i32, i32) {
    %c0_i32 = arith.constant 0 : i32
    %c0_i32_0 = arith.constant 0 : i32
    return %c0_i32, %arg0 : i32, i32
  }
  func.func @transform_1(%arg0: i32) -> (i32, i32) {
    %c0_i32 = arith.constant 0 : i32
    %c0_i32_0 = arith.constant 0 : i32
    return %c0_i32, %arg0 : i32, i32
  }
}

</mosaic_0001>

<llo_original>
// kernel: tpu_custom_call.1
$region0: #{tpu_custom_call.1}
  #allocation0 [shape = 'u32[]', space=smem, size = 0x4, offset = 0x4, fixed_abs, tag = 'smem constant byte address 0x4 - core index']
  #allocation1 [shape = 'u32[144,128]{1,0:T(1,128)}', space=vmem, size = 0x12000, scoped, tag = 'internal scratch']
  %s0 = inlined_call_operand.vmem [shape: f32[12,8], index: 0, kind: input, shape index: {}]
  %s1 = inlined_call_operand.vmem [shape: f32[16,8], index: 1, kind: output, shape index: {}]
  %s2 = sld [smem:[#allocation0]]
  $region14: #{tpu_custom_call.1} parent=0
    _
  %s4 = ssub.s32 1, %s2
  %s5 = scalar_select 0, %s4, %s2
  // Predicated region
  $region2: #{tpu_custom_call.1} parent=0 // pred_check
    _
  $region3: #{tpu_custom_call.1} parent=0 // pred_check_branch
    %7 = sbr.rel (0) target = $region5
  $region4: #{tpu_custom_call.1} parent=0 // pred_region
    _
  $region5: #{tpu_custom_call.1} parent=0 // pred_fallthru
    _
  %vm8 = vcmask 1042432
  %v9 = vsel %vm8, 0.0, 1.0
  %v10 = vld [vmem:[%s0] sm:$0xff]
  %v11 = vld [vmem:[%s0 + $0x8] sm:$0xf]
  %v13 = vrot.slane %v9, 4
  %vm15 = vcmask 1043456
  %v16 = vsel %vm15, %v11, %v13
  %vm17 = vcmask 64512
  %18 = vst.msk [vmem:[%s1] sm:$0xff] %vm17, %v10
  %19 = vst.msk [vmem:[%s1 + $0x8] sm:$0xff] %vm17, %v16
  // Predicated region
  $region6: #{tpu_custom_call.1} parent=0 // pred_check
    _
  $region7: #{tpu_custom_call.1} parent=0 // pred_check_branch
    %21 = sbr.rel (0) target = $region9
  $region8: #{tpu_custom_call.1} parent=0 // pred_region
    _
  $region9: #{tpu_custom_call.1} parent=0 // pred_fallthru
    _
  // Predicated region
  $region10: #{tpu_custom_call.1} parent=0 // pred_check
    _
  $region11: #{tpu_custom_call.1} parent=0 // pred_check_branch
    %23 = sbr.rel (0) target = $region13
  $region12: #{tpu_custom_call.1} parent=0 // pred_region
    _
  $region13: #{tpu_custom_call.1} parent=0 // pred_fallthru
    _

</llo_original>
